<compile_context>
chip_gen: v7x
topology: tpu7x:2x2x1
jax: 0.10.0
libtpu: 0.0.40
codegen_flags: <defaults>
</compile_context>

<pallas_src>
import jax
import jax.numpy as jnp
from jax.experimental import pallas as pl
from jax.experimental.pallas import tpu as pltpu

EMBED_DIM = 32
OUT_DIM = 3            # per head
FUSED_OUT = 2 * OUT_DIM


def _illum_kernel(ids_ref, t1_ref, w2_ref, b2_ref, out_ref):
    """One camera tile: gather(table@W1+b1) -> ReLU -> @W2 + b2 -> activations."""
    tc = ids_ref.shape[0]
    n_images = t1_ref.shape[0]

    # ---- embedding gather fused with layer 1 (one MXU matmul) ----------------
    # T1[n] already holds table[n] @ W1_fused + b1_fused, so selecting row
    # ids[i] IS "embedding -> linear1" for camera i.  The select is a one-hot
    # matmul: exact (multipliers are 0.0 / 1.0), runs on the MXU, and avoids
    # any gather lowering / (C,E) HBM round trip.  Out-of-range padded ids in a
    # ragged last tile just give an all-zero one-hot row (output writeback of
    # padded rows is clipped by Pallas anyway).
    ids = ids_ref[...]                                               # (tc, 1) i32
    img = jax.lax.broadcasted_iota(jnp.int32, (tc, n_images), 1)
    onehot = jnp.where(img == ids, 1.0, 0.0).astype(t1_ref.dtype)    # (tc, N)
    h = jnp.dot(onehot, t1_ref[...], preferred_element_type=jnp.float32)
    h = jnp.maximum(h, 0.0)                                          # ReLU in f32

    # ---- fused block-diagonal layer 2: (tc, 2E) @ (2E, 6) ---------------------
    o = jnp.dot(h.astype(w2_ref.dtype), w2_ref[...],
                preferred_element_type=jnp.float32) + b2_ref[...]    # (tc, 6) f32

    # ---- per-head activation with a single tanh -------------------------------
    # k-head columns of W2/b2 were pre-scaled by 0.5, so
    # sigmoid(x) = 0.5 * tanh(x/2) + 0.5 costs no extra EUP work.
    t = jnp.tanh(o)
    lane = jax.lax.broadcasted_iota(jnp.int32, o.shape, 1)
    out = jnp.where(lane < OUT_DIM, 0.5 * t + 0.5, t)
    out_ref[...] = out.astype(out_ref.dtype)


def fuse_params(params, compute_dtype=jnp.bfloat16):
    """One-time parameter preprocessing (call at init / after optimizer steps).

    Weights are (in_features, out_features); transpose PyTorch nn.Linear.weight
    ((out, in)) when importing a real checkpoint.
    """
    embed_table, W1k, b1k, W2k, b2k, W1b, b1b, W2b, b2b = params
    E = embed_table.shape[1]
    f32 = jnp.float32
    hi = jax.lax.Precision.HIGHEST

    # Layer 1 of both heads, folded through the embedding table:
    #   T1[n] = table[n] @ [W1k | W1b] + [b1k | b1b]          (N, 2E)
    W1 = jnp.concatenate([W1k, W1b], axis=1).astype(f32)
    b1 = jnp.concatenate([b1k, b1b], axis=0).astype(f32)
    T1 = jnp.dot(embed_table.astype(f32), W1, precision=hi) + b1

    # Layer 2 of both heads as one block-diagonal matrix; k-head columns are
    # pre-scaled by 0.5 (single-tanh activation trick in the kernel).
    W2 = jnp.zeros((2 * E, FUSED_OUT), f32)
    W2 = W2.at[:E, 0:OUT_DIM].set(0.5 * W2k.astype(f32))
    W2 = W2.at[E:, OUT_DIM:FUSED_OUT].set(W2b.astype(f32))
    b2 = jnp.concatenate([0.5 * b2k.astype(f32), b2b.astype(f32)], axis=0)
    b2 = b2.reshape(1, FUSED_OUT)

    # Matmul operands in compute_dtype (bf16 default); biases stay f32 so all
    # elementwise math in the kernel is f32 (v5e has no bf16 VPU/EUP).
    return (T1.astype(compute_dtype), W2.astype(compute_dtype), b2)


def _choose_tiling(C, tile_c, n_images, two_e):
    # Bound the per-tile (tc, N) one-hot intermediate to ~4 MiB of VMEM so the
    # kernel never stresses any generation's VMEM (v7x: 64 MiB physical).
    vmem_rows = max(64, (4 << 20) // (4 * max(n_images, two_e)))
    tile_c = max(8, (min(tile_c, vmem_rows) // 8) * 8)
    if C <= 512:
        # Tiny batch: one block (block == full dim dodges the (8,128) rule);
        # launch latency dominates and tiling would only add grid bookkeeping.
        return C, (1,)
    # Large batch: keep >= 2 tiles so both v7x TensorCores get work through the
    # "parallel" grid dimension.  Ragged last tile is safe: Pallas clips the
    # output writeback and padded ids only produce all-zero one-hot rows.
    half = ((pl.cdiv(C, 2) + 7) // 8) * 8
    tc = min(tile_c, half)
    return tc, (pl.cdiv(C, tc),)


def illumination_opt_forward(embed_ids, fused_params, *, tile_c=4096):
    """embed_ids (C,) int -> (adjust_k (C,1,3), adjust_b (C,1,3))."""
    T1, W2, b2 = fused_params
    n_images, two_e = T1.shape
    C = embed_ids.shape[0]
    ids = embed_ids.astype(jnp.int32).reshape(C, 1)

    tc, grid = _choose_tiling(C, tile_c, n_images, two_e)

    flops = C * (2 * n_images * two_e + 2 * two_e * FUSED_OUT)
    bytes_accessed = (ids.size * 4
                      + T1.size * T1.dtype.itemsize
                      + W2.size * W2.dtype.itemsize
                      + b2.size * 4
                      + C * FUSED_OUT * 4)

    out = pl.pallas_call(
        _illum_kernel,
        out_shape=jax.ShapeDtypeStruct((C, FUSED_OUT), jnp.float32),
        grid=grid,
        in_specs=[
            pl.BlockSpec((tc, 1), lambda i: (i, 0)),                 # ids tile
            pl.BlockSpec((n_images, two_e), lambda i: (0, 0)),       # T1 (resident)
            pl.BlockSpec((two_e, FUSED_OUT), lambda i: (0, 0)),      # W2 (resident)
            pl.BlockSpec((1, FUSED_OUT), lambda i: (0, 0)),          # b2 (resident)
        ],
        out_specs=pl.BlockSpec((tc, FUSED_OUT), lambda i: (i, 0)),
        compiler_params=pltpu.CompilerParams(
            dimension_semantics=("parallel",)),
        cost_estimate=pl.CostEstimate(
            flops=flops,
            transcendentals=C * FUSED_OUT,
            bytes_accessed=bytes_accessed),
    )(ids, T1, W2, b2)

    # TODO(synk): for very large C a lane-dense (6, C) output (in-kernel XLU
    # transpose) would avoid 6/128 masked stores; irrelevant at typical C.
    adjust_k = out[:, None, 0:OUT_DIM]         # (C, 1, 3)  == .unsqueeze(1)
    adjust_b = out[:, None, OUT_DIM:FUSED_OUT]
    return adjust_k, adjust_b


def reference_forward(embed_ids, params):
    """Pure-JAX reference mirroring the PyTorch forward (true-f32 matmuls)."""
    embed_table, W1k, b1k, W2k, b2k, W1b, b1b, W2b, b2b = params
    hi = jax.lax.Precision.HIGHEST
    emb = embed_table[embed_ids]
    hk = jnp.maximum(jnp.dot(emb, W1k, precision=hi) + b1k, 0.0)
    k = jax.nn.sigmoid(jnp.dot(hk, W2k, precision=hi) + b2k)
    hb = jnp.maximum(jnp.dot(emb, W1b, precision=hi) + b1b, 0.0)
    b = jnp.tanh(jnp.dot(hb, W2b, precision=hi) + b2b)
    return k[:, None, :], b[:, None, :]


def init_params(key, num_images, embed_dim=EMBED_DIM):
    ks = jax.random.split(key, 9)

    def lin(kw, kb, fan_in, fan_out):
        bound = 1.0 / jnp.sqrt(fan_in)
        w = jax.random.uniform(kw, (fan_in, fan_out), jnp.float32, -bound, bound)
        b = jax.random.uniform(kb, (fan_out,), jnp.float32, -bound, bound)
        return w, b

    # The real module zero-inits the embedding table; use random values here so
    # the numerical check is non-degenerate (forward semantics unchanged).
    embed_table = 0.1 * jax.random.normal(ks[0], (num_images, embed_dim),
                                          jnp.float32)
    W1k, b1k = lin(ks[1], ks[2], embed_dim, embed_dim)
    W2k, b2k = lin(ks[3], ks[4], embed_dim, OUT_DIM)
    W1b, b1b = lin(ks[5], ks[6], embed_dim, embed_dim)
    W2b, b2b = lin(ks[7], ks[8], embed_dim, OUT_DIM)
    return (embed_table, W1k, b1k, W2k, b2k, W1b, b1b, W2b, b2b)


if __name__ == "__main__":
    key = jax.random.PRNGKey(0)
    k_param, k_ids = jax.random.split(key, 2)

    num_images = 10
    C = 8                                    # cameras in this batch

    params = init_params(k_param, num_images, EMBED_DIM)
    embed_ids = jax.random.randint(k_ids, (C,), 0, num_images, jnp.int32)

    ref_k, ref_b = reference_forward(embed_ids, params)

    # f32 compute path: must match the reference tightly.
    fused_f32 = fuse_params(params, compute_dtype=jnp.float32)
    k32, b32 = illumination_opt_forward(embed_ids, fused_f32)
    k32 = jax.block_until_ready(k32)
    b32 = jax.block_until_ready(b32)
    assert k32.shape == (C, 1, 3) and b32.shape == (C, 1, 3)
    assert jnp.allclose(k32, ref_k, rtol=1e-5, atol=1e-5), (
        float(jnp.max(jnp.abs(k32 - ref_k))))
    assert jnp.allclose(b32, ref_b, rtol=1e-5, atol=1e-5), (
        float(jnp.max(jnp.abs(b32 - ref_b))))

    # bf16 matmul-operand path (default): native MXU dtype, halved weight DMA.
    fused_bf16 = fuse_params(params)  # compute_dtype=jnp.bfloat16
    kbf, bbf = illumination_opt_forward(embed_ids, fused_bf16)
    kbf = jax.block_until_ready(kbf)
    bbf = jax.block_until_ready(bbf)
    assert jnp.allclose(kbf, ref_k, rtol=2e-2, atol=2e-2), (
        float(jnp.max(jnp.abs(kbf - ref_k))))
    assert jnp.allclose(bbf, ref_b, rtol=2e-2, atol=2e-2), (
        float(jnp.max(jnp.abs(bbf - ref_b))))

    print("KERNEL_OK")
</pallas_src>

<mosaic_0001>
module attributes {stable_mosaic.version = 11 : i64} {
  func.func @_illum_kernel(%arg0: i32, %arg1: memref<8x1xi32, #tpu.memory_space<vmem>>, %arg2: memref<10x64xf32, #tpu.memory_space<vmem>>, %arg3: memref<64x6xf32, #tpu.memory_space<vmem>>, %arg4: memref<1x6xf32, #tpu.memory_space<vmem>>, %arg5: memref<8x6xf32, #tpu.memory_space<vmem>>) attributes {dimension_semantics = [#tpu.dimension_semantics<parallel>], iteration_bounds = array<i64: 1>, scalar_prefetch = 0 : i64, scratch_operands = 0 : i64, tpu.core_type = #tpu.core_type<tc>, window_params = [{transform_indices = @transform_0, window_bounds = array<i64: 8, 1>}, {pipeline_mode = #tpu.pipeline_mode<synchronous>, transform_indices = @transform_1, window_bounds = array<i64: 10, 64>}, {pipeline_mode = #tpu.pipeline_mode<synchronous>, transform_indices = @transform_2, window_bounds = array<i64: 64, 6>}, {pipeline_mode = #tpu.pipeline_mode<synchronous>, transform_indices = @transform_3, window_bounds = array<i64: 1, 6>}, {transform_indices = @transform_4, window_bounds = array<i64: 8, 6>}]} {
    %c0 = arith.constant 0 : index
    %c0_0 = arith.constant 0 : index
    %0 = vector.load %arg1[%c0, %c0_0] : memref<8x1xi32, #tpu.memory_space<vmem>>, vector<8x1xi32>
    %1 = tpu.iota {dimensions = array<i32: 1>} : vector<8x10xi32>
    %2 = vector.broadcast %0 : vector<8x1xi32> to vector<8x10xi32>
    %3 = arith.cmpi eq, %1, %2 : vector<8x10xi32>
    %cst = arith.constant 1.000000e+00 : f32
    %cst_1 = arith.constant 0.000000e+00 : f32
    %4 = vector.broadcast %cst : f32 to vector<8x10xf32>
    %5 = vector.broadcast %cst_1 : f32 to vector<8x10xf32>
    %6 = arith.select %3, %4, %5 : vector<8x10xi1>, vector<8x10xf32>
    %c0_2 = arith.constant 0 : index
    %c0_3 = arith.constant 0 : index
    %7 = vector.load %arg2[%c0_2, %c0_3] : memref<10x64xf32, #tpu.memory_space<vmem>>, vector<10x64xf32>
    %cst_4 = arith.constant dense<0.000000e+00> : vector<8x64xf32>
    %8 = tpu.matmul %6, %7, %cst_4 {dimension_numbers = #tpu.dot_dimension_numbers<[1], [0], [0], [1], [0, 0, 1, 1], [], []>} : vector<8x10xf32>, vector<10x64xf32>, vector<8x64xf32> -> vector<8x64xf32>
    %cst_5 = arith.constant 0.000000e+00 : f32
    %9 = vector.broadcast %cst_5 : f32 to vector<8x64xf32>
    %10 = arith.maximumf %8, %9 : vector<8x64xf32>
    %c0_6 = arith.constant 0 : index
    %c0_7 = arith.constant 0 : index
    %11 = vector.load %arg3[%c0_6, %c0_7] : memref<64x6xf32, #tpu.memory_space<vmem>>, vector<64x6xf32>
    %cst_8 = arith.constant dense<0.000000e+00> : vector<8x6xf32>
    %12 = tpu.matmul %10, %11, %cst_8 {dimension_numbers = #tpu.dot_dimension_numbers<[1], [0], [0], [1], [0, 0, 1, 1], [], []>} : vector<8x64xf32>, vector<64x6xf32>, vector<8x6xf32> -> vector<8x6xf32>
    %c0_9 = arith.constant 0 : index
    %c0_10 = arith.constant 0 : index
    %13 = vector.load %arg4[%c0_9, %c0_10] : memref<1x6xf32, #tpu.memory_space<vmem>>, vector<1x6xf32>
    %14 = vector.broadcast %13 : vector<1x6xf32> to vector<8x6xf32>
    %15 = arith.addf %12, %14 : vector<8x6xf32>
    %16 = math.tanh %15 : vector<8x6xf32>
    %17 = tpu.iota {dimensions = array<i32: 1>} : vector<8x6xi32>
    %c3_i32 = arith.constant 3 : i32
    %18 = vector.broadcast %c3_i32 : i32 to vector<8x6xi32>
    %19 = arith.cmpi slt, %17, %18 : vector<8x6xi32>
    %cst_11 = arith.constant 5.000000e-01 : f32
    %20 = vector.broadcast %cst_11 : f32 to vector<8x6xf32>
    %21 = arith.mulf %20, %16 : vector<8x6xf32>
    %cst_12 = arith.constant 5.000000e-01 : f32
    %22 = vector.broadcast %cst_12 : f32 to vector<8x6xf32>
    %23 = arith.addf %21, %22 : vector<8x6xf32>
    %24 = arith.select %19, %23, %16 : vector<8x6xi1>, vector<8x6xf32>
    %c0_13 = arith.constant 0 : index
    %c0_14 = arith.constant 0 : index
    %25 = vector.load %arg5[%c0_13, %c0_14] : memref<8x6xf32, #tpu.memory_space<vmem>>, vector<8x6xf32>
    tpu.vector_store %arg5[%c0_13, %c0_14], %24 {strides = array<i32>} : memref<8x6xf32, #tpu.memory_space<vmem>>, vector<8x6xf32>,
    return
  }
  func.func @transform_0(%arg0: i32) -> (i32, i32) {
    %c0_i32 = arith.constant 0 : i32
    %c0_i32_0 = arith.constant 0 : i32
    return %arg0, %c0_i32 : i32, i32
  }
  func.func @transform_1(%arg0: i32) -> (i32, i32) {
    %c0_i32 = arith.constant 0 : i32
    %c0_i32_0 = arith.constant 0 : i32
    %c0_i32_1 = arith.constant 0 : i32
    return %c0_i32, %c0_i32_0 : i32, i32
  }
  func.func @transform_2(%arg0: i32) -> (i32, i32) {
    %c0_i32 = arith.constant 0 : i32
    %c0_i32_0 = arith.constant 0 : i32
    %c0_i32_1 = arith.constant 0 : i32
    return %c0_i32, %c0_i32_0 : i32, i32
  }
  func.func @transform_3(%arg0: i32) -> (i32, i32) {
    %c0_i32 = arith.constant 0 : i32
    %c0_i32_0 = arith.constant 0 : i32
    %c0_i32_1 = arith.constant 0 : i32
    return %c0_i32, %c0_i32_0 : i32, i32
  }
  func.func @transform_4(%arg0: i32) -> (i32, i32) {
    %c0_i32 = arith.constant 0 : i32
    %c0_i32_0 = arith.constant 0 : i32
    return %arg0, %c0_i32 : i32, i32
  }
}

</mosaic_0001>

<llo_original>
// kernel: tpu_custom_call.1
$region0: #{tpu_custom_call.1}
  #allocation0 [shape = 'u32[]', space=smem, size = 0x4, offset = 0x4, fixed_abs, tag = 'smem constant byte address 0x4 - core index']
  #allocation1 [shape = 'u32[144,128]{1,0:T(1,128)}', space=vmem, size = 0x12000, scoped, tag = 'internal scratch']
  %s0 = inlined_call_operand.vmem [shape: s32[8,1], index: 0, kind: input, shape index: {}]
  %s1 = inlined_call_operand.vmem [shape: f32[10,64], index: 1, kind: input, shape index: {}]
  %s2 = inlined_call_operand.vmem [shape: f32[64,6], index: 2, kind: input, shape index: {}]
  %s3 = inlined_call_operand.vmem [shape: f32[1,6], index: 3, kind: input, shape index: {}]
  %s4 = inlined_call_operand.hbm [shape: f32[8,6], index: 4, kind: output, shape index: {}]
  %s5 = sld [smem:[#allocation0]]
  $region26: #{tpu_custom_call.1} parent=0
    _
  %s7 = ssub.s32 1, %s5
  %s8 = scalar_select 0, %s7, %s5
  $region1: #{tpu_custom_call.1} parent=0
    #allocation2 [shape = 'u8[4096]{0}', space=vmem, size = 0x1000, scoped, tag = 'output window, operand 0, single buffered']
    #allocation3 [shape = 's32[1]{0}', space=sflag, size = 0x4, scoped, tag = 'scoped memory for tpu_custom_call.1']
    %9 = vsyncpa [#allocation3], 0
    // Predicated region
    $region2: #{tpu_custom_call.1} parent=1 // pred_check
      _
    $region3: #{tpu_custom_call.1} parent=1 // pred_check_branch
      %11 = sbr.rel (0) target = $region5
    $region4: #{tpu_custom_call.1} parent=1 // pred_region
      _
    $region5: #{tpu_custom_call.1} parent=1 // pred_fallthru
      _
    // Predicated region
    $region6: #{tpu_custom_call.1} parent=1 // pred_check
      _
    $region7: #{tpu_custom_call.1} parent=1 // pred_check_branch
      %13 = sbr.rel (0) target = $region9
    $region8: #{tpu_custom_call.1} parent=1 // pred_region
      _
    $region9: #{tpu_custom_call.1} parent=1 // pred_fallthru
      _
    // Predicated region
    $region10: #{tpu_custom_call.1} parent=1 // pred_check
      _
    $region11: #{tpu_custom_call.1} parent=1 // pred_check_branch
      %15 = sbr.rel (0) target = $region13
    $region12: #{tpu_custom_call.1} parent=1 // pred_region
      _
    $region13: #{tpu_custom_call.1} parent=1 // pred_fallthru
      _
    // Predicated region
    $region14: #{tpu_custom_call.1} parent=1 // pred_check
      _
    $region15: #{tpu_custom_call.1} parent=1 // pred_check_branch
      %17 = sbr.rel (0) target = $region17
    $region16: #{tpu_custom_call.1} parent=1 // pred_region
      _
    $region17: #{tpu_custom_call.1} parent=1 // pred_fallthru
      _
    %v18 = vld [vmem:[%s0] sm:$0xff]
    %v19 = vlaneseq
    %v20 = vand.u32 %v19, 127
    %21 = vset.pattern.permute.xlu0 0
    %22 = vperm.xlu0 %21, %v18
    %v23 = vpop.permute.xlu0 %22
    %vm24 = vcmp.eq.s32.totalorder %v20, %v23
    %v25 = vsel %vm24, 1.0, 0.0
    %v26 = vld [vmem:[%s1] sm:$0xff]
    %v27 = vld [vmem:[%s1 + $0x8] sm:$0x3]
    %vm28 = vcmask 80896
    %v30 = vsel %vm28, %v25, 0
    %vm32 = vcmask 1041408
    %v34 = vsel %vm32, %v27, 0
    %36 = vmatprep.subr.mxu0 0.0
    %37 = vmatpush1.msra.mxu0 %v26
    %38 = vmatprep.subr.mxu0 0.0
    %39 = vmatpush1.msra.mxu0 %v34
    %40 = vmatprep.subr.mxu0 0.0
    %41 = vmatpush1.msra.mxu0 0.0
    %42 = vmatprep.subr.mxu0 0.0
    %43 = vmatpush1.msra.mxu0 0.0
    %44 = vmatprep.subr.mxu0 0.0
    %45 = vmatpush1.msra.mxu0 0.0
    %46 = vmatprep.subr.mxu0 0.0
    %47 = vmatpush1.msra.mxu0 0.0
    %48 = vmatprep.subr.mxu0 0.0
    %49 = vmatpush1.msra.mxu0 0.0
    %50 = vmatprep.subr.mxu0 0.0
    %51 = vmatpush1.msra.mxu0 0.0
    %52 = vmatprep.subr.mxu0 0.0
    %53 = vmatpush1.msra.mxu0 0.0
    %54 = vmatprep.subr.mxu0 0.0
    %55 = vmatpush1.msra.mxu0 0.0
    %56 = vmatprep.subr.mxu0 0.0
    %57 = vmatpush1.msra.mxu0 0.0
    %58 = vmatprep.subr.mxu0 0.0
    %59 = vmatpush1.msra.mxu0 0.0
    %60 = vmatprep.subr.mxu0 0.0
    %61 = vmatpush1.msra.mxu0 0.0
    %62 = vmatprep.subr.mxu0 0.0
    %63 = vmatpush1.msra.mxu0 0.0
    %64 = vmatprep.subr.mxu0 0.0
    %65 = vmatpush1.msra.mxu0 0.0
    %66 = vmatprep.subr.mxu0 0.0
    %67 = vmatpush1.msra.mxu0 0.0
    %68 = vmatprep.subr.mxu0 0.0
    %69 = vmatpush1.msra.mxu0 0.0
    %70 = vmatprep.subr.mxu0 0.0
    %71 = vmatpush1.msra.mxu0 0.0
    %72 = vmatprep.subr.mxu0 0.0
    %73 = vmatpush1.msra.mxu0 0.0
    %74 = vmatprep.subr.mxu0 0.0
    %75 = vmatpush1.msra.mxu0 0.0
    %76 = vmatprep.subr.mxu0 0.0
    %77 = vmatpush1.msra.mxu0 0.0
    %78 = vmatprep.subr.mxu0 0.0
    %79 = vmatpush1.msra.mxu0 0.0
    %80 = vmatprep.subr.mxu0 0.0
    %81 = vmatpush1.msra.mxu0 0.0
    %82 = vmatprep.subr.mxu0 0.0
    %83 = vmatpush1.msra.mxu0 0.0
    %84 = vmatprep.subr.mxu0 0.0
    %85 = vmatpush1.msra.mxu0 0.0
    %86 = vmatprep.subr.mxu0 0.0
    %87 = vmatpush1.msra.mxu0 0.0
    %88 = vmatprep.subr.mxu0 0.0
    %89 = vmatpush1.msra.mxu0 0.0
    %90 = vmatprep.subr.mxu0 0.0
    %91 = vmatpush1.msra.mxu0 0.0
    %92 = vmatprep.subr.mxu0 0.0
    %93 = vmatpush1.msra.mxu0 0.0
    %94 = vmatprep.subr.mxu0 0.0
    %95 = vmatpush1.msra.mxu0 0.0
    %96 = vmatprep.subr.mxu0 0.0
    %97 = vmatpush1.msra.mxu0 0.0
    %98 = vmatprep.subr.mxu0 0.0
    %99 = vmatpush1.msra.mxu0 0.0
    %100 = vmatprep.mubr.f32.mxu0 0.0
    %101 = vmatmul.mubr.f32.gmra.mrb[0].mxu0 %v30
    %v102 = vpop.f32.mrb[0].mxu0
    %v103 = vadd.f32 0.0, %v102
    %v104 = vpop.f32.mrb[0].mxu0
    %105 = vdwg.mxu0
    %v106 = vmax.f32 %v103, 0.0
    %v107 = vld [vmem:[%s2] sm:$0xff]
    %v108 = vld [vmem:[%s2 + $0x8] sm:$0xff]
    %v109 = vld [vmem:[%s2 + $0x10] sm:$0xff]
    %v110 = vld [vmem:[%s2 + $0x18] sm:$0xff]
    %v111 = vld [vmem:[%s2 + $0x20] sm:$0xff]
    %v112 = vld [vmem:[%s2 + $0x28] sm:$0xff]
    %v113 = vld [vmem:[%s2 + $0x30] sm:$0xff]
    %v114 = vld [vmem:[%s2 + $0x38] sm:$0xff]
    %v115 = vld [vmem:[%s3] sm:$0x1]
    %v117 = vlaneseq
    %v118 = vshrl.u32 %v117, 7
    %v119 = vsub.s32 0, %v118
    %v120 = vrot.slane %v115, %v119
    %vm122 = vcmask 523264
    %v124 = vsel %vm122, %v106, 0
    %126 = vmatprep.subr.mxu0 0.0
    %127 = vmatpush1.msra.mxu0 %v107
    %128 = vmatprep.subr.mxu0 0.0
    %129 = vmatpush1.msra.mxu0 %v108
    %130 = vmatprep.subr.mxu0 0.0
    %131 = vmatpush1.msra.mxu0 %v109
    %132 = vmatprep.subr.mxu0 0.0
    %133 = vmatpush1.msra.mxu0 %v110
    %134 = vmatprep.subr.mxu0 0.0
    %135 = vmatpush1.msra.mxu0 %v111
    %136 = vmatprep.subr.mxu0 0.0
    %137 = vmatpush1.msra.mxu0 %v112
    %138 = vmatprep.subr.mxu0 0.0
    %139 = vmatpush1.msra.mxu0 %v113
    %140 = vmatprep.subr.mxu0 0.0
    %141 = vmatpush1.msra.mxu0 %v114
    %142 = vmatprep.subr.mxu0 0.0
    %143 = vmatpush1.msra.mxu0 0.0
    %144 = vmatprep.subr.mxu0 0.0
    %145 = vmatpush1.msra.mxu0 0.0
    %146 = vmatprep.subr.mxu0 0.0
    %147 = vmatpush1.msra.mxu0 0.0
    %148 = vmatprep.subr.mxu0 0.0
    %149 = vmatpush1.msra.mxu0 0.0
    %150 = vmatprep.subr.mxu0 0.0
    %151 = vmatpush1.msra.mxu0 0.0
    %152 = vmatprep.subr.mxu0 0.0
    %153 = vmatpush1.msra.mxu0 0.0
    %154 = vmatprep.subr.mxu0 0.0
    %155 = vmatpush1.msra.mxu0 0.0
    %156 = vmatprep.subr.mxu0 0.0
    %157 = vmatpush1.msra.mxu0 0.0
    %158 = vmatprep.subr.mxu0 0.0
    %159 = vmatpush1.msra.mxu0 0.0
    %160 = vmatprep.subr.mxu0 0.0
    %161 = vmatpush1.msra.mxu0 0.0
    %162 = vmatprep.subr.mxu0 0.0
    %163 = vmatpush1.msra.mxu0 0.0
    %164 = vmatprep.subr.mxu0 0.0
    %165 = vmatpush1.msra.mxu0 0.0
    %166 = vmatprep.subr.mxu0 0.0
    %167 = vmatpush1.msra.mxu0 0.0
    %168 = vmatprep.subr.mxu0 0.0
    %169 = vmatpush1.msra.mxu0 0.0
    %170 = vmatprep.subr.mxu0 0.0
    %171 = vmatpush1.msra.mxu0 0.0
    %172 = vmatprep.subr.mxu0 0.0
    %173 = vmatpush1.msra.mxu0 0.0
    %174 = vmatprep.subr.mxu0 0.0
    %175 = vmatpush1.msra.mxu0 0.0
    %176 = vmatprep.subr.mxu0 0.0
    %177 = vmatpush1.msra.mxu0 0.0
    %178 = vmatprep.subr.mxu0 0.0
    %179 = vmatpush1.msra.mxu0 0.0
    %180 = vmatprep.subr.mxu0 0.0
    %181 = vmatpush1.msra.mxu0 0.0
    %182 = vmatprep.subr.mxu0 0.0
    %183 = vmatpush1.msra.mxu0 0.0
    %184 = vmatprep.subr.mxu0 0.0
    %185 = vmatpush1.msra.mxu0 0.0
    %186 = vmatprep.subr.mxu0 0.0
    %187 = vmatpush1.msra.mxu0 0.0
    %188 = vmatprep.subr.mxu0 0.0
    %189 = vmatpush1.msra.mxu0 0.0
    %190 = vmatprep.mubr.f32.mxu0 0.0
    %191 = vmatmul.mubr.f32.gmra.mrb[0].mxu0 %v124
    %v192 = vpop.f32.mrb[0].mxu0
    %v193 = vadd.f32 %v120, %v192
    %v194 = vpop.f32.mrb[0].mxu0
    %195 = vdwg.mxu0
    %v196 = vtanh.pop %v193
    %vm197 = vcmp.lt.s32.totalorder %v20, 3
    %v198 = vmul.f32 %v196, 0.5
    %v199 = vadd.f32 %v198, 0.5
    %v200 = vsel %vm197, %v199, %v196
    %vm201 = vcmask 48128
    %202 = vst.msk [vmem:[#allocation2] sm:$0xff] %vm201, %v200
    // Predicated region
    $region18: #{tpu_custom_call.1} parent=1 // pred_check
      _
    $region19: #{tpu_custom_call.1} parent=1 // pred_check_branch
      %204 = sbr.rel (0) target = $region21
    $region20: #{tpu_custom_call.1} parent=1 // pred_region
      %s206 = ssub.s32 128, 128
      %207 = vsyncadd [#allocation3], %s206
      %s209 = sshll.u32 [#allocation2], 4
      %s210 = int_to_ptr.vmem [resolvable:$true] %s209
      %212 = dma.vmem_to_hbm [thread:$0]  %s210, 128, %s4, [#allocation3]
    $region21: #{tpu_custom_call.1} parent=1 // pred_fallthru
      _
    // Predicated region
    $region22: #{tpu_custom_call.1} parent=1 // pred_check
      _
    $region23: #{tpu_custom_call.1} parent=1 // pred_check_branch
      %214 = sbr.rel (0) target = $region25
    $region24: #{tpu_custom_call.1} parent=1 // pred_region
      %215 = dma.done [#allocation3], 128
    $region25: #{tpu_custom_call.1} parent=1 // pred_fallthru
      _
    %216 = vsyncpa [#allocation3], 1

</llo_original>
